<compile_context>
chip_gen: v5e
topology: v5e:2x2
jax: 0.10.0
libtpu: 0.0.40
codegen_flags: <defaults>
</compile_context>

<pallas_src>
import jax
import jax.numpy as jnp
from jax.experimental import pallas as pl
from jax.experimental.pallas import tpu as pltpu

LANE = 128
SUBLANE = 8


def _round_up(x, m):
    return (x + m - 1) // m * m


def dqn_kernel(x_ref, w1_ref, b1_ref, w2_ref, b2_ref, o_ref):
    # x stays f32 in HBM; cast to the matmul dtype on the VPU (hidden under
    # DMA / MXU work) so the wrapper never adds an extra HBM pass.
    x = x_ref[...].astype(w1_ref.dtype)
    # fc1 on the MXU with f32 accumulation; bias-add + ReLU on the VPU in f32
    # (so the bf16 weight path is also correct on v5e, which has no bf16 VPU).
    h = jnp.dot(x, w1_ref[...], preferred_element_type=jnp.float32)
    h = jnp.maximum(h + b1_ref[...], 0.0)          # [1, H] broadcast over [TB, H]
    # fc2 on the MXU at the true n_actions width (output block == full last dim,
    # so the HBM write is contiguous and only covers useful bytes).
    q = jnp.dot(h.astype(w2_ref.dtype), w2_ref[...],
                preferred_element_type=jnp.float32)
    o_ref[...] = (q + b2_ref[...]).astype(o_ref.dtype)


def deep_q_network_forward(x, w1, b1, w2, b2, *, block_b=None,
                           out_dtype=jnp.float32):
    """Forward pass of DeepQNetwork.

    x  : [B, input_dim]  (any float dtype; cast to the matmul dtype in-kernel)
    w1 : [input_dim, 128]      (transposed vs. PyTorch's [128, input_dim])
    b1 : [1, 128] or [128]     (kept f32)
    w2 : [128, n_actions]      (transposed vs. PyTorch's [n_actions, 128])
    b2 : [1, n_actions] or [n_actions]
    block_b   : batch tile size hint (default 1024, 2048 for B >= 4096)
    out_dtype : output dtype (f32 default; bf16 halves the output write)
    returns Q-values: [B, n_actions] in out_dtype.

    Pass bf16 weights (w1/w2) to halve weight + activation MXU traffic on
    v5e/v6e/v7x; accumulation and the bias/ReLU epilogue stay in f32.
    """
    B, input_dim = x.shape
    hidden = w1.shape[1]
    n_actions = w2.shape[1]

    b1 = b1.reshape(1, hidden).astype(jnp.float32)
    b2 = b2.reshape(1, n_actions).astype(jnp.float32)

    mm_dtype = w1.dtype
    mm_itemsize = jnp.dtype(mm_dtype).itemsize
    out_itemsize = jnp.dtype(out_dtype).itemsize

    # ---- batch tiling (no wrapper-side padding) ------------------------------
    if block_b is None:
        block_b = 2048 if B >= 4096 else 1024     # amortize ~0.35us per grid step
    align = 16 if mm_itemsize == 2 else SUBLANE   # bf16 packs (16,128) per vreg
    # Aim for >= 2 grid steps so the "parallel" batch axis can shard across
    # v7x's two TensorCores (harmless extra step on single-TC v5e/v6e).
    tb = max(align, _round_up(pl.cdiv(B, 2), align))
    tb = min(tb, _round_up(block_b, align), _round_up(B, align))
    grid = (pl.cdiv(B, tb),)                      # ragged last block: writes masked

    # ---- VMEM footprint (lane-padded accounting) and a tight limit -----------
    in_lanes = _round_up(input_dim, LANE)
    h_lanes = _round_up(hidden, LANE)
    a_lanes = _round_up(n_actions, LANE)
    footprint = (
        2 * tb * in_lanes * 4                         # x tiles (f32), double-buffered
        + 2 * tb * a_lanes * out_itemsize             # out tiles (lane-padded in VMEM), 2 bufs
        + tb * in_lanes * mm_itemsize                 # in-kernel cast of x (bf16 path)
        + tb * h_lanes * 4                            # f32 hidden activations
        + tb * a_lanes * 4                            # f32 fc2 accumulator
        # resident weights/biases: the pipeline still gives them two buffers
        # (pl.Buffered(1) would trim this, but it is only a few tens of KiB here).
        + 2 * (_round_up(input_dim, SUBLANE) * h_lanes
               + _round_up(hidden, SUBLANE) * a_lanes) * mm_itemsize
        + 2 * SUBLANE * (h_lanes + a_lanes) * 4
    )
    # ~2x headroom, capped well below v7x's 64 MiB/TC physical VMEM so Mosaic
    # temporaries always fit; plenty of room on v5e/v6e (128 MiB).
    vmem_limit = int(min(48 * 1024 * 1024, max(8 * 1024 * 1024, 2 * footprint)))

    cost = pl.CostEstimate(
        flops=2 * B * (input_dim * hidden + hidden * n_actions),
        transcendentals=0,
        bytes_accessed=(B * input_dim * x.dtype.itemsize
                        + (input_dim * hidden + hidden * n_actions) * mm_itemsize
                        + (hidden + n_actions) * 4
                        + B * n_actions * out_itemsize),
    )

    out = pl.pallas_call(
        dqn_kernel,
        out_shape=jax.ShapeDtypeStruct((B, n_actions), out_dtype),
        grid_spec=pl.GridSpec(
            grid=grid,
            in_specs=[
                pl.BlockSpec((tb, input_dim), lambda i: (i, 0)),       # x: batch-tiled
                pl.BlockSpec((input_dim, hidden), lambda i: (0, 0)),   # w1: VMEM-resident
                pl.BlockSpec((1, hidden), lambda i: (0, 0)),           # b1: VMEM-resident
                pl.BlockSpec((hidden, n_actions), lambda i: (0, 0)),   # w2: VMEM-resident
                pl.BlockSpec((1, n_actions), lambda i: (0, 0)),        # b2: VMEM-resident
            ],
            out_specs=pl.BlockSpec((tb, n_actions), lambda i: (i, 0)),
        ),
        compiler_params=pltpu.CompilerParams(
            dimension_semantics=("parallel",),       # megacore shard on v7x
            vmem_limit_bytes=vmem_limit,
        ),
        cost_estimate=cost,
    )(x, w1, b1, w2, b2)

    return out


def init_params(key, input_dim, n_actions, hidden=128):
    """Deterministic init mimicking PyTorch nn.Linear default
    (uniform(-1/sqrt(fan_in), 1/sqrt(fan_in))).  Stored pre-transposed [in, out]."""
    k1, k2, k3, k4 = jax.random.split(key, 4)
    bound1 = 1.0 / jnp.sqrt(jnp.float32(input_dim))
    bound2 = 1.0 / jnp.sqrt(jnp.float32(hidden))
    w1 = jax.random.uniform(k1, (input_dim, hidden), jnp.float32, -bound1, bound1)
    b1 = jax.random.uniform(k2, (1, hidden), jnp.float32, -bound1, bound1)
    w2 = jax.random.uniform(k3, (hidden, n_actions), jnp.float32, -bound2, bound2)
    b2 = jax.random.uniform(k4, (1, n_actions), jnp.float32, -bound2, bound2)
    return w1, b1, w2, b2


if __name__ == "__main__":
    # Small shapes consistent with the module's forward.
    batch = 8
    input_dim = 16
    n_actions = 4

    key = jax.random.PRNGKey(0)
    kx, kp = jax.random.split(key)
    x = jax.random.normal(kx, (batch, input_dim), jnp.float32)
    w1, b1, w2, b2 = init_params(kp, input_dim, n_actions)

    # Reference in plain JAX (same math as the PyTorch forward).
    ref = jnp.maximum(x @ w1 + b1, 0.0) @ w2 + b2

    # f32 matmul path (tight tolerance) ----------------------------------------
    q = jax.block_until_ready(deep_q_network_forward(x, w1, b1, w2, b2))
    assert q.shape == (batch, n_actions)
    assert jnp.allclose(q, ref, atol=1e-5, rtol=1e-5)

    # Ragged batch (not a multiple of the tile) exercises the masked last block.
    x_r = jax.random.normal(kx, (10, input_dim), jnp.float32)
    ref_r = jnp.maximum(x_r @ w1 + b1, 0.0) @ w2 + b2
    q_r = jax.block_until_ready(
        deep_q_network_forward(x_r, w1, b1, w2, b2, block_b=8))
    assert q_r.shape == (10, n_actions)
    assert jnp.allclose(q_r, ref_r, atol=1e-5, rtol=1e-5)

    # bf16 weight/activation path (good on v5e/v6e/v7x; f32 accumulation) ------
    q_bf16 = jax.block_until_ready(deep_q_network_forward(
        x, w1.astype(jnp.bfloat16), b1, w2.astype(jnp.bfloat16), b2))
    assert q_bf16.shape == (batch, n_actions)
    assert jnp.allclose(q_bf16, ref, atol=5e-2, rtol=5e-2)

    # NOTE: optimizer / scheduler / loss in __init__ are training-time state,
    # not part of the forward pass, so they are intentionally not ported.
    print("KERNEL_OK")
</pallas_src>

<mosaic_0001>
module attributes {stable_mosaic.version = 11 : i64} {
  func.func @dqn_kernel(%arg0: i32, %arg1: memref<8x16xf32, #tpu.memory_space<vmem>>, %arg2: memref<16x128xf32, #tpu.memory_space<vmem>>, %arg3: memref<1x128xf32, #tpu.memory_space<vmem>>, %arg4: memref<128x4xf32, #tpu.memory_space<vmem>>, %arg5: memref<1x4xf32, #tpu.memory_space<vmem>>, %arg6: memref<8x4xf32, #tpu.memory_space<vmem>>) attributes {dimension_semantics = [#tpu.dimension_semantics<parallel>], iteration_bounds = array<i64: 1>, scalar_prefetch = 0 : i64, scratch_operands = 0 : i64, tpu.core_type = #tpu.core_type<tc>, window_params = [{transform_indices = @transform_0, window_bounds = array<i64: 8, 16>}, {pipeline_mode = #tpu.pipeline_mode<synchronous>, transform_indices = @transform_1, window_bounds = array<i64: 16, 128>}, {pipeline_mode = #tpu.pipeline_mode<synchronous>, transform_indices = @transform_2, window_bounds = array<i64: 1, 128>}, {pipeline_mode = #tpu.pipeline_mode<synchronous>, transform_indices = @transform_3, window_bounds = array<i64: 128, 4>}, {pipeline_mode = #tpu.pipeline_mode<synchronous>, transform_indices = @transform_4, window_bounds = array<i64: 1, 4>}, {transform_indices = @transform_5, window_bounds = array<i64: 8, 4>}]} {
    %c0 = arith.constant 0 : index
    %c0_0 = arith.constant 0 : index
    %0 = vector.load %arg1[%c0, %c0_0] : memref<8x16xf32, #tpu.memory_space<vmem>>, vector<8x16xf32>
    %c0_1 = arith.constant 0 : index
    %c0_2 = arith.constant 0 : index
    %1 = vector.load %arg2[%c0_1, %c0_2] : memref<16x128xf32, #tpu.memory_space<vmem>>, vector<16x128xf32>
    %cst = arith.constant dense<0.000000e+00> : vector<8x128xf32>
    %2 = tpu.matmul %0, %1, %cst {dimension_numbers = #tpu.dot_dimension_numbers<[1], [0], [0], [1], [0, 0, 1, 1], [], []>} : vector<8x16xf32>, vector<16x128xf32>, vector<8x128xf32> -> vector<8x128xf32>
    %c0_3 = arith.constant 0 : index
    %c0_4 = arith.constant 0 : index
    %3 = vector.load %arg3[%c0_3, %c0_4] : memref<1x128xf32, #tpu.memory_space<vmem>>, vector<1x128xf32>
    %4 = vector.broadcast %3 : vector<1x128xf32> to vector<8x128xf32>
    %5 = arith.addf %2, %4 : vector<8x128xf32>
    %cst_5 = arith.constant 0.000000e+00 : f32
    %6 = vector.broadcast %cst_5 : f32 to vector<8x128xf32>
    %7 = arith.maximumf %5, %6 : vector<8x128xf32>
    %c0_6 = arith.constant 0 : index
    %c0_7 = arith.constant 0 : index
    %8 = vector.load %arg4[%c0_6, %c0_7] : memref<128x4xf32, #tpu.memory_space<vmem>>, vector<128x4xf32>
    %cst_8 = arith.constant dense<0.000000e+00> : vector<8x4xf32>
    %9 = tpu.matmul %7, %8, %cst_8 {dimension_numbers = #tpu.dot_dimension_numbers<[1], [0], [0], [1], [0, 0, 1, 1], [], []>} : vector<8x128xf32>, vector<128x4xf32>, vector<8x4xf32> -> vector<8x4xf32>
    %c0_9 = arith.constant 0 : index
    %c0_10 = arith.constant 0 : index
    %10 = vector.load %arg5[%c0_9, %c0_10] : memref<1x4xf32, #tpu.memory_space<vmem>>, vector<1x4xf32>
    %11 = vector.broadcast %10 : vector<1x4xf32> to vector<8x4xf32>
    %12 = arith.addf %9, %11 : vector<8x4xf32>
    %c0_11 = arith.constant 0 : index
    %c0_12 = arith.constant 0 : index
    %13 = vector.load %arg6[%c0_11, %c0_12] : memref<8x4xf32, #tpu.memory_space<vmem>>, vector<8x4xf32>
    tpu.vector_store %arg6[%c0_11, %c0_12], %12 {strides = array<i32>} : memref<8x4xf32, #tpu.memory_space<vmem>>, vector<8x4xf32>,
    return
  }
  func.func @transform_0(%arg0: i32) -> (i32, i32) {
    %c0_i32 = arith.constant 0 : i32
    %c0_i32_0 = arith.constant 0 : i32
    return %arg0, %c0_i32 : i32, i32
  }
  func.func @transform_1(%arg0: i32) -> (i32, i32) {
    %c0_i32 = arith.constant 0 : i32
    %c0_i32_0 = arith.constant 0 : i32
    %c0_i32_1 = arith.constant 0 : i32
    return %c0_i32, %c0_i32_0 : i32, i32
  }
  func.func @transform_2(%arg0: i32) -> (i32, i32) {
    %c0_i32 = arith.constant 0 : i32
    %c0_i32_0 = arith.constant 0 : i32
    %c0_i32_1 = arith.constant 0 : i32
    return %c0_i32, %c0_i32_0 : i32, i32
  }
  func.func @transform_3(%arg0: i32) -> (i32, i32) {
    %c0_i32 = arith.constant 0 : i32
    %c0_i32_0 = arith.constant 0 : i32
    %c0_i32_1 = arith.constant 0 : i32
    return %c0_i32, %c0_i32_0 : i32, i32
  }
  func.func @transform_4(%arg0: i32) -> (i32, i32) {
    %c0_i32 = arith.constant 0 : i32
    %c0_i32_0 = arith.constant 0 : i32
    %c0_i32_1 = arith.constant 0 : i32
    return %c0_i32, %c0_i32_0 : i32, i32
  }
  func.func @transform_5(%arg0: i32) -> (i32, i32) {
    %c0_i32 = arith.constant 0 : i32
    %c0_i32_0 = arith.constant 0 : i32
    return %arg0, %c0_i32 : i32, i32
  }
}

</mosaic_0001>

<llo_original>
// kernel: tpu_custom_call.1
$region0: #{tpu_custom_call.1}
  #allocation0 [shape = 'u32[]', space=smem, size = 0x4, offset = 0x4, fixed_abs, tag = 'smem constant byte address 0x4 - core index']
  #allocation1 [shape = 'u32[72,128]{1,0:T(1,128)}', space=vmem, size = 0x9000, scoped, tag = 'internal scratch']
  %s0 = inlined_call_operand.vmem [shape: f32[8,16], index: 0, kind: input, shape index: {}]
  %s1 = inlined_call_operand.vmem [shape: f32[16,128], index: 1, kind: input, shape index: {}]
  %s2 = inlined_call_operand.vmem [shape: f32[1,128], index: 2, kind: input, shape index: {}]
  %s3 = inlined_call_operand.vmem [shape: f32[128,4], index: 3, kind: input, shape index: {}]
  %s4 = inlined_call_operand.vmem [shape: f32[1,4], index: 4, kind: input, shape index: {}]
  %s5 = inlined_call_operand.vmem [shape: f32[8,4], index: 5, kind: output, shape index: {}]
  %s6 = sld [smem:[#allocation0]]
  $region30: #{tpu_custom_call.1} parent=0
    _
  %s8 = ssub.s32 1, %s6
  %s9 = scalar_select 0, %s8, %s6
  // Predicated region
  $region2: #{tpu_custom_call.1} parent=0 // pred_check
    _
  $region3: #{tpu_custom_call.1} parent=0 // pred_check_branch
    %11 = sbr.rel (0) target = $region5
  $region4: #{tpu_custom_call.1} parent=0 // pred_region
    _
  $region5: #{tpu_custom_call.1} parent=0 // pred_fallthru
    _
  // Predicated region
  $region6: #{tpu_custom_call.1} parent=0 // pred_check
    _
  $region7: #{tpu_custom_call.1} parent=0 // pred_check_branch
    %13 = sbr.rel (0) target = $region9
  $region8: #{tpu_custom_call.1} parent=0 // pred_region
    _
  $region9: #{tpu_custom_call.1} parent=0 // pred_fallthru
    _
  // Predicated region
  $region10: #{tpu_custom_call.1} parent=0 // pred_check
    _
  $region11: #{tpu_custom_call.1} parent=0 // pred_check_branch
    %15 = sbr.rel (0) target = $region13
  $region12: #{tpu_custom_call.1} parent=0 // pred_region
    _
  $region13: #{tpu_custom_call.1} parent=0 // pred_fallthru
    _
  // Predicated region
  $region14: #{tpu_custom_call.1} parent=0 // pred_check
    _
  $region15: #{tpu_custom_call.1} parent=0 // pred_check_branch
    %17 = sbr.rel (0) target = $region17
  $region16: #{tpu_custom_call.1} parent=0 // pred_region
    _
  $region17: #{tpu_custom_call.1} parent=0 // pred_fallthru
    _
  // Predicated region
  $region18: #{tpu_custom_call.1} parent=0 // pred_check
    _
  $region19: #{tpu_custom_call.1} parent=0 // pred_check_branch
    %19 = sbr.rel (0) target = $region21
  $region20: #{tpu_custom_call.1} parent=0 // pred_region
    _
  $region21: #{tpu_custom_call.1} parent=0 // pred_fallthru
    _
  %v20 = vld [vmem:[%s0] sm:$0xff]
  %v21 = vld [vmem:[%s1] sm:$0xff]
  %v22 = vld [vmem:[%s1 + $0x8] sm:$0xff]
  %v23 = vld [vmem:[%s2] sm:$0x1]
  %v25 = vperm.slane %v23, 0
  %vm27 = vcmask 130048
  %v29 = vsel %vm27, %v20, 0
  %31 = vmatpush.msra.mxu0 0.0
  %32 = vmatpush.msra.mxu0 0.0
  %33 = vmatpush.msra.mxu0 0.0
  %34 = vmatpush.msra.mxu0 0.0
  %35 = vmatpush.msra.mxu0 0.0
  %36 = vmatpush.msra.mxu0 0.0
  %37 = vmatpush.msra.mxu0 0.0
  %38 = vmatpush.msra.mxu0 0.0
  %39 = vmatpush.msra.mxu0 0.0
  %40 = vmatpush.msra.mxu0 0.0
  %41 = vmatpush.msra.mxu0 0.0
  %42 = vmatpush.msra.mxu0 0.0
  %43 = vmatpush.msra.mxu0 0.0
  %44 = vmatpush.msra.mxu0 0.0
  %45 = vmatpush.msra.mxu0 %v22
  %46 = vmatpush.msra.mxu0 %v21
  %47 = vmatmul.f32.gmra.mxu0 %v29
  %v48 = vpop.f32.mrf.mxu0
  %v49 = vadd.f32 %v25, %v48
  %50 = vdwg.mxu0
  %v51 = vmax.f32 %v49, 0.0
  %v52 = vld [vmem:[%s3] sm:$0xff]
  %v53 = vld [vmem:[%s3 + $0x8] sm:$0xff]
  %v54 = vld [vmem:[%s3 + $0x10] sm:$0xff]
  %v55 = vld [vmem:[%s3 + $0x18] sm:$0xff]
  %v56 = vld [vmem:[%s3 + $0x20] sm:$0xff]
  %v57 = vld [vmem:[%s3 + $0x28] sm:$0xff]
  %v58 = vld [vmem:[%s3 + $0x30] sm:$0xff]
  %v59 = vld [vmem:[%s3 + $0x38] sm:$0xff]
  %v60 = vld [vmem:[%s3 + $0x40] sm:$0xff]
  %v61 = vld [vmem:[%s3 + $0x48] sm:$0xff]
  %v62 = vld [vmem:[%s3 + $0x50] sm:$0xff]
  %v63 = vld [vmem:[%s3 + $0x58] sm:$0xff]
  %v64 = vld [vmem:[%s3 + $0x60] sm:$0xff]
  %v65 = vld [vmem:[%s3 + $0x68] sm:$0xff]
  %v66 = vld [vmem:[%s3 + $0x70] sm:$0xff]
  %v67 = vld [vmem:[%s3 + $0x78] sm:$0xff]
  %v68 = vld [vmem:[%s4] sm:$0x1]
  %v70 = vperm.slane %v68, 0
  %72 = vmatpush.msra.mxu0 %v67
  %73 = vmatpush.msra.mxu0 %v66
  %74 = vmatpush.msra.mxu0 %v65
  %75 = vmatpush.msra.mxu0 %v64
  %76 = vmatpush.msra.mxu0 %v63
  %77 = vmatpush.msra.mxu0 %v62
  %78 = vmatpush.msra.mxu0 %v61
  %79 = vmatpush.msra.mxu0 %v60
  %80 = vmatpush.msra.mxu0 %v59
  %81 = vmatpush.msra.mxu0 %v58
  %82 = vmatpush.msra.mxu0 %v57
  %83 = vmatpush.msra.mxu0 %v56
  %84 = vmatpush.msra.mxu0 %v55
  %85 = vmatpush.msra.mxu0 %v54
  %86 = vmatpush.msra.mxu0 %v53
  %87 = vmatpush.msra.mxu0 %v52
  %88 = vmatmul.f32.gmra.mxu0 %v51
  %v89 = vpop.f32.mrf.mxu0
  %v90 = vadd.f32 %v70, %v89
  %91 = vdwg.mxu0
  %vm92 = vcmask 31744
  %93 = vst.msk [vmem:[%s5] sm:$0xff] %vm92, %v90
  // Predicated region
  $region22: #{tpu_custom_call.1} parent=0 // pred_check
    _
  $region23: #{tpu_custom_call.1} parent=0 // pred_check_branch
    %95 = sbr.rel (0) target = $region25
  $region24: #{tpu_custom_call.1} parent=0 // pred_region
    _
  $region25: #{tpu_custom_call.1} parent=0 // pred_fallthru
    _
  // Predicated region
  $region26: #{tpu_custom_call.1} parent=0 // pred_check
    _
  $region27: #{tpu_custom_call.1} parent=0 // pred_check_branch
    %97 = sbr.rel (0) target = $region29
  $region28: #{tpu_custom_call.1} parent=0 // pred_region
    _
  $region29: #{tpu_custom_call.1} parent=0 // pred_fallthru
    _

</llo_original>
